<compile_context>
chip_gen: v7x
topology: tpu7x:2x2x1
jax: 0.10.0
libtpu: 0.0.40
codegen_flags: <defaults>
</compile_context>

<pallas_src>
import jax
import jax.numpy as jnp
from jax.experimental import pallas as pl
from jax.experimental.pallas import tpu as pltpu

DATA_SIZE = 784   # 28 * 28
H1 = 128
H2 = 64
OUT = 10
OUT_PAD = 128     # lane-dense output width; real logits live in [:, :OUT]
TM_MAX = 1024     # batch tile (sublane-aligned, amortizes per-step overhead)


def mlp_kernel(x_ref, w1_ref, b1_ref, w2_ref, b2_ref, w3_ref, b3_ref, o_ref):
    """Fused 3-layer MLP forward on one batch tile.

    x_ref : (tm, 784) f32      w1_ref: (784, 128) bf16   b1_ref: (1, 128) f32
    w2_ref: (128, 64) bf16     b2_ref: (1, 64)  f32
    w3_ref: (64, 128) bf16 (zero-padded cols 10..127)     b3_ref: (1, 128) f32
    o_ref : (tm, 128) bf16
    """
    # In-kernel bf16 cast (VPU, hidden under the x DMA); f32 accumulation.
    x = x_ref[...].astype(jnp.bfloat16)
    # fc1 + ReLU
    h1 = jnp.dot(x, w1_ref[...], preferred_element_type=jnp.float32) + b1_ref[...]
    h1 = jnp.maximum(h1, 0.0)
    # fc2 + ReLU
    h2 = jnp.dot(h1.astype(jnp.bfloat16), w2_ref[...],
                 preferred_element_type=jnp.float32) + b2_ref[...]
    h2 = jnp.maximum(h2, 0.0)
    # fc3 (raw logits), lane-dense padded store, bf16 writeback
    logits = jnp.dot(h2.astype(jnp.bfloat16), w3_ref[...],
                     preferred_element_type=jnp.float32) + b3_ref[...]
    o_ref[...] = logits.astype(o_ref.dtype)


def _round_up(n, m):
    return (n + m - 1) // m * m


@jax.jit
def mlp_forward(x_nchw, w1, b1, w2, b2, w3, b3):
    # Glue: x.view(-1, DATA_SIZE)
    x = x_nchw.reshape(-1, DATA_SIZE).astype(jnp.float32)
    B = x.shape[0]

    # Tile selection: as big as possible (up to TM_MAX) but at least 4 grid
    # steps when B is large (2 TCs on v7x each need >=2 steps to pipeline);
    # always a multiple of 8 (sublane alignment). No batch padding: Pallas
    # masks the ragged edge block.
    tm = min(TM_MAX, max(8, _round_up(pl.cdiv(B, 4), 8)))
    grid = (pl.cdiv(B, tm),)

    # Weights bf16 (native MXU input, tiny one-time casts), biases f32.
    w1b = w1.astype(jnp.bfloat16)
    w2b = w2.astype(jnp.bfloat16)
    b1f = b1.astype(jnp.float32)
    b2f = b2.astype(jnp.float32)
    # Lane-dense fc3: zero-pad output features 10 -> 128.
    w3p = jnp.zeros((H2, OUT_PAD), jnp.bfloat16).at[:, :OUT].set(w3.astype(jnp.bfloat16))
    b3p = jnp.zeros((1, OUT_PAD), jnp.float32).at[:, :OUT].set(b3.astype(jnp.float32))

    in_specs = [
        pl.BlockSpec((tm, DATA_SIZE), lambda i: (i, 0)),   # x: tiled over batch (f32)
        pl.BlockSpec((DATA_SIZE, H1), lambda i: (0, 0)),   # w1 (resident)
        pl.BlockSpec((1, H1),         lambda i: (0, 0)),   # b1
        pl.BlockSpec((H1, H2),        lambda i: (0, 0)),   # w2
        pl.BlockSpec((1, H2),         lambda i: (0, 0)),   # b2
        pl.BlockSpec((H2, OUT_PAD),   lambda i: (0, 0)),   # w3 (padded)
        pl.BlockSpec((1, OUT_PAD),    lambda i: (0, 0)),   # b3 (padded)
    ]
    out_spec = pl.BlockSpec((tm, OUT_PAD), lambda i: (i, 0))

    out = pl.pallas_call(
        mlp_kernel,
        out_shape=jax.ShapeDtypeStruct((B, OUT_PAD), jnp.bfloat16),
        grid=grid,
        in_specs=in_specs,
        out_specs=out_spec,
        compiler_params=pltpu.CompilerParams(
            dimension_semantics=("parallel",),
        ),
    )(x, w1b, b1f, w2b, b2f, w3p, b3p)

    # Drop the lane padding; cast the tiny sliced logits back to f32.
    return out[:, :OUT].astype(jnp.float32)


def init_params(key):
    """PyTorch nn.Linear-style init: uniform(-1/sqrt(fan_in), +1/sqrt(fan_in))."""
    ks = jax.random.split(key, 6)

    def linear(kw, kb, fan_in, fan_out):
        bound = 1.0 / jnp.sqrt(fan_in)
        # stored as (in, out) so the kernel computes x @ W + b
        w = jax.random.uniform(kw, (fan_in, fan_out), jnp.float32, -bound, bound)
        b = jax.random.uniform(kb, (1, fan_out), jnp.float32, -bound, bound)
        return w, b

    w1, b1 = linear(ks[0], ks[1], DATA_SIZE, H1)
    w2, b2 = linear(ks[2], ks[3], H1, H2)
    w3, b3 = linear(ks[4], ks[5], H2, OUT)
    return w1, b1, w2, b2, w3, b3


def ref_forward(x_nchw, w1, b1, w2, b2, w3, b3):
    """Plain-JAX reference with the same bf16-input / f32-accum recipe."""
    x = x_nchw.reshape(-1, DATA_SIZE).astype(jnp.bfloat16)
    h1 = jnp.maximum(
        jnp.dot(x, w1.astype(jnp.bfloat16), preferred_element_type=jnp.float32) + b1, 0.0)
    h2 = jnp.maximum(
        jnp.dot(h1.astype(jnp.bfloat16), w2.astype(jnp.bfloat16),
                preferred_element_type=jnp.float32) + b2, 0.0)
    return jnp.dot(h2.astype(jnp.bfloat16), w3.astype(jnp.bfloat16),
                   preferred_element_type=jnp.float32) + b3


if __name__ == "__main__":
    key = jax.random.PRNGKey(0)
    k_x, k_p = jax.random.split(key)
    params = init_params(k_p)

    # Small shapes: primary batch=2, plus ragged (B=3) and multi-block (B=37)
    # cases to exercise the masked edge block.
    for B in (2, 3, 37):
        x = jax.random.normal(jax.random.fold_in(k_x, B), (B, 1, 28, 28), jnp.float32)
        out = jax.block_until_ready(mlp_forward(x, *params))
        ref = ref_forward(x, *params)
        assert out.shape == (B, OUT), (out.shape, B)
        assert jnp.allclose(out, ref, atol=2e-2, rtol=2e-2), \
            f"mismatch at B={B}: max abs err {jnp.max(jnp.abs(out - ref))}"

    print("KERNEL_OK")
</pallas_src>

<mosaic_0001>
module attributes {stable_mosaic.version = 11 : i64} {
  func.func @mlp_kernel(%arg0: i32, %arg1: memref<8x784xf32, #tpu.memory_space<vmem>>, %arg2: memref<784x128xbf16, #tpu.memory_space<vmem>>, %arg3: memref<1x128xf32, #tpu.memory_space<vmem>>, %arg4: memref<128x64xbf16, #tpu.memory_space<vmem>>, %arg5: memref<1x64xf32, #tpu.memory_space<vmem>>, %arg6: memref<64x128xbf16, #tpu.memory_space<vmem>>, %arg7: memref<1x128xf32, #tpu.memory_space<vmem>>, %arg8: memref<8x128xbf16, #tpu.memory_space<vmem>>) attributes {dimension_semantics = [#tpu.dimension_semantics<parallel>], iteration_bounds = array<i64: 1>, scalar_prefetch = 0 : i64, scratch_operands = 0 : i64, tpu.core_type = #tpu.core_type<tc>, window_params = [{transform_indices = @transform_0, window_bounds = array<i64: 8, 784>}, {pipeline_mode = #tpu.pipeline_mode<synchronous>, transform_indices = @transform_1, window_bounds = array<i64: 784, 128>}, {pipeline_mode = #tpu.pipeline_mode<synchronous>, transform_indices = @transform_2, window_bounds = array<i64: 1, 128>}, {pipeline_mode = #tpu.pipeline_mode<synchronous>, transform_indices = @transform_3, window_bounds = array<i64: 128, 64>}, {pipeline_mode = #tpu.pipeline_mode<synchronous>, transform_indices = @transform_4, window_bounds = array<i64: 1, 64>}, {pipeline_mode = #tpu.pipeline_mode<synchronous>, transform_indices = @transform_5, window_bounds = array<i64: 64, 128>}, {pipeline_mode = #tpu.pipeline_mode<synchronous>, transform_indices = @transform_6, window_bounds = array<i64: 1, 128>}, {transform_indices = @transform_7, window_bounds = array<i64: 8, 128>}]} {
    %c0 = arith.constant 0 : index
    %c0_0 = arith.constant 0 : index
    %0 = vector.load %arg1[%c0, %c0_0] : memref<8x784xf32, #tpu.memory_space<vmem>>, vector<8x784xf32>
    %1 = arith.truncf %0 : vector<8x784xf32> to vector<8x784xbf16>
    %c0_1 = arith.constant 0 : index
    %c0_2 = arith.constant 0 : index
    %2 = vector.load %arg2[%c0_1, %c0_2] : memref<784x128xbf16, #tpu.memory_space<vmem>>, vector<784x128xbf16>
    %cst = arith.constant dense<0.000000e+00> : vector<8x128xf32>
    %3 = tpu.matmul %1, %2, %cst {dimension_numbers = #tpu.dot_dimension_numbers<[1], [0], [0], [1], [0, 0, 1, 1], [], []>} : vector<8x784xbf16>, vector<784x128xbf16>, vector<8x128xf32> -> vector<8x128xf32>
    %c0_3 = arith.constant 0 : index
    %c0_4 = arith.constant 0 : index
    %4 = vector.load %arg3[%c0_3, %c0_4] : memref<1x128xf32, #tpu.memory_space<vmem>>, vector<1x128xf32>
    %5 = vector.broadcast %4 : vector<1x128xf32> to vector<8x128xf32>
    %6 = arith.addf %3, %5 : vector<8x128xf32>
    %cst_5 = arith.constant 0.000000e+00 : f32
    %7 = vector.broadcast %cst_5 : f32 to vector<8x128xf32>
    %8 = arith.maximumf %6, %7 : vector<8x128xf32>
    %9 = arith.truncf %8 : vector<8x128xf32> to vector<8x128xbf16>
    %c0_6 = arith.constant 0 : index
    %c0_7 = arith.constant 0 : index
    %10 = vector.load %arg4[%c0_6, %c0_7] : memref<128x64xbf16, #tpu.memory_space<vmem>>, vector<128x64xbf16>
    %cst_8 = arith.constant dense<0.000000e+00> : vector<8x64xf32>
    %11 = tpu.matmul %9, %10, %cst_8 {dimension_numbers = #tpu.dot_dimension_numbers<[1], [0], [0], [1], [0, 0, 1, 1], [], []>} : vector<8x128xbf16>, vector<128x64xbf16>, vector<8x64xf32> -> vector<8x64xf32>
    %c0_9 = arith.constant 0 : index
    %c0_10 = arith.constant 0 : index
    %12 = vector.load %arg5[%c0_9, %c0_10] : memref<1x64xf32, #tpu.memory_space<vmem>>, vector<1x64xf32>
    %13 = vector.broadcast %12 : vector<1x64xf32> to vector<8x64xf32>
    %14 = arith.addf %11, %13 : vector<8x64xf32>
    %cst_11 = arith.constant 0.000000e+00 : f32
    %15 = vector.broadcast %cst_11 : f32 to vector<8x64xf32>
    %16 = arith.maximumf %14, %15 : vector<8x64xf32>
    %17 = arith.truncf %16 : vector<8x64xf32> to vector<8x64xbf16>
    %c0_12 = arith.constant 0 : index
    %c0_13 = arith.constant 0 : index
    %18 = vector.load %arg6[%c0_12, %c0_13] : memref<64x128xbf16, #tpu.memory_space<vmem>>, vector<64x128xbf16>
    %cst_14 = arith.constant dense<0.000000e+00> : vector<8x128xf32>
    %19 = tpu.matmul %17, %18, %cst_14 {dimension_numbers = #tpu.dot_dimension_numbers<[1], [0], [0], [1], [0, 0, 1, 1], [], []>} : vector<8x64xbf16>, vector<64x128xbf16>, vector<8x128xf32> -> vector<8x128xf32>
    %c0_15 = arith.constant 0 : index
    %c0_16 = arith.constant 0 : index
    %20 = vector.load %arg7[%c0_15, %c0_16] : memref<1x128xf32, #tpu.memory_space<vmem>>, vector<1x128xf32>
    %21 = vector.broadcast %20 : vector<1x128xf32> to vector<8x128xf32>
    %22 = arith.addf %19, %21 : vector<8x128xf32>
    %23 = arith.truncf %22 : vector<8x128xf32> to vector<8x128xbf16>
    %c0_17 = arith.constant 0 : index
    %c0_18 = arith.constant 0 : index
    %24 = vector.load %arg8[%c0_17, %c0_18] : memref<8x128xbf16, #tpu.memory_space<vmem>>, vector<8x128xbf16>
    tpu.vector_store %arg8[%c0_17, %c0_18], %23 {strides = array<i32>} : memref<8x128xbf16, #tpu.memory_space<vmem>>, vector<8x128xbf16>,
    return
  }
  func.func @transform_0(%arg0: i32) -> (i32, i32) {
    %c0_i32 = arith.constant 0 : i32
    %c0_i32_0 = arith.constant 0 : i32
    return %arg0, %c0_i32 : i32, i32
  }
  func.func @transform_1(%arg0: i32) -> (i32, i32) {
    %c0_i32 = arith.constant 0 : i32
    %c0_i32_0 = arith.constant 0 : i32
    %c0_i32_1 = arith.constant 0 : i32
    return %c0_i32, %c0_i32_0 : i32, i32
  }
  func.func @transform_2(%arg0: i32) -> (i32, i32) {
    %c0_i32 = arith.constant 0 : i32
    %c0_i32_0 = arith.constant 0 : i32
    %c0_i32_1 = arith.constant 0 : i32
    return %c0_i32, %c0_i32_0 : i32, i32
  }
  func.func @transform_3(%arg0: i32) -> (i32, i32) {
    %c0_i32 = arith.constant 0 : i32
    %c0_i32_0 = arith.constant 0 : i32
    %c0_i32_1 = arith.constant 0 : i32
    return %c0_i32, %c0_i32_0 : i32, i32
  }
  func.func @transform_4(%arg0: i32) -> (i32, i32) {
    %c0_i32 = arith.constant 0 : i32
    %c0_i32_0 = arith.constant 0 : i32
    %c0_i32_1 = arith.constant 0 : i32
    return %c0_i32, %c0_i32_0 : i32, i32
  }
  func.func @transform_5(%arg0: i32) -> (i32, i32) {
    %c0_i32 = arith.constant 0 : i32
    %c0_i32_0 = arith.constant 0 : i32
    %c0_i32_1 = arith.constant 0 : i32
    return %c0_i32, %c0_i32_0 : i32, i32
  }
  func.func @transform_6(%arg0: i32) -> (i32, i32) {
    %c0_i32 = arith.constant 0 : i32
    %c0_i32_0 = arith.constant 0 : i32
    %c0_i32_1 = arith.constant 0 : i32
    return %c0_i32, %c0_i32_0 : i32, i32
  }
  func.func @transform_7(%arg0: i32) -> (i32, i32) {
    %c0_i32 = arith.constant 0 : i32
    %c0_i32_0 = arith.constant 0 : i32
    return %arg0, %c0_i32 : i32, i32
  }
}

</mosaic_0001>

<llo_original>
// kernel: mlp_forward.1
$region0: #{mlp_forward.1}
  #allocation0 [shape = 'u32[]', space=smem, size = 0x4, offset = 0x4, fixed_abs, tag = 'smem constant byte address 0x4 - core index']
  #allocation1 [shape = 'u32[144,128]{1,0:T(1,128)}', space=vmem, size = 0x12000, scoped, tag = 'internal scratch']
  %s0 = inlined_call_operand.vmem [shape: f32[2,784], index: 0, kind: input, shape index: {}]
  %s1 = inlined_call_operand.vmem [shape: bf16[784,128], index: 1, kind: input, shape index: {}]
  %s2 = inlined_call_operand.vmem [shape: f32[1,128], index: 2, kind: input, shape index: {}]
  %s3 = inlined_call_operand.vmem [shape: bf16[128,64], index: 3, kind: input, shape index: {}]
  %s4 = inlined_call_operand.vmem [shape: f32[1,64], index: 4, kind: input, shape index: {}]
  %s5 = inlined_call_operand.vmem [shape: bf16[64,128], index: 5, kind: input, shape index: {}]
  %s6 = inlined_call_operand.vmem [shape: f32[1,128], index: 6, kind: input, shape index: {}]
  %s7 = inlined_call_operand.vmem [shape: bf16[2,128], index: 7, kind: output, shape index: {}]
  %s8 = sld [smem:[#allocation0]]
  $region68: #{mlp_forward.1} parent=0
    _
  %s10 = ssub.s32 1, %s8
  %s11 = scalar_select 0, %s10, %s8
  $region1: #{mlp_forward.1} parent=0
    #allocation2 [shape = 'u8[2048]{0}', space=vmem, size = 0x800, scoped, tag = 'output window, operand 0, single buffered']
    // Predicated region
    $region2: #{mlp_forward.1} parent=1 // pred_check
      _
    $region3: #{mlp_forward.1} parent=1 // pred_check_branch
      %13 = sbr.rel (0) target = $region5
    $region4: #{mlp_forward.1} parent=1 // pred_region
      _
    $region5: #{mlp_forward.1} parent=1 // pred_fallthru
      _
    // Predicated region
    $region6: #{mlp_forward.1} parent=1 // pred_check
      _
    $region7: #{mlp_forward.1} parent=1 // pred_check_branch
      %15 = sbr.rel (0) target = $region9
    $region8: #{mlp_forward.1} parent=1 // pred_region
      _
    $region9: #{mlp_forward.1} parent=1 // pred_fallthru
      _
    // Predicated region
    $region10: #{mlp_forward.1} parent=1 // pred_check
      _
    $region11: #{mlp_forward.1} parent=1 // pred_check_branch
      %17 = sbr.rel (0) target = $region13
    $region12: #{mlp_forward.1} parent=1 // pred_region
      _
    $region13: #{mlp_forward.1} parent=1 // pred_fallthru
      _
    // Predicated region
    $region14: #{mlp_forward.1} parent=1 // pred_check
      _
    $region15: #{mlp_forward.1} parent=1 // pred_check_branch
      %19 = sbr.rel (0) target = $region17
    $region16: #{mlp_forward.1} parent=1 // pred_region
      _
    $region17: #{mlp_forward.1} parent=1 // pred_fallthru
      _
    // Predicated region
    $region18: #{mlp_forward.1} parent=1 // pred_check
      _
    $region19: #{mlp_forward.1} parent=1 // pred_check_branch
      %21 = sbr.rel (0) target = $region21
    $region20: #{mlp_forward.1} parent=1 // pred_region
      _
    $region21: #{mlp_forward.1} parent=1 // pred_fallthru
      _
    // Predicated region
    $region22: #{mlp_forward.1} parent=1 // pred_check
      _
    $region23: #{mlp_forward.1} parent=1 // pred_check_branch
      %23 = sbr.rel (0) target = $region25
    $region24: #{mlp_forward.1} parent=1 // pred_region
      _
    $region25: #{mlp_forward.1} parent=1 // pred_fallthru
      _
    // Predicated region
    $region26: #{mlp_forward.1} parent=1 // pred_check
      _
    $region27: #{mlp_forward.1} parent=1 // pred_check_branch
      %25 = sbr.rel (0) target = $region29
    $region28: #{mlp_forward.1} parent=1 // pred_region
      _
    $region29: #{mlp_forward.1} parent=1 // pred_fallthru
      _
    %v27 = vld [vmem:[%s0] sm:$0xff]
    %v28 = vld [vmem:[%s0 + $0x8] sm:$0x3f]
    %v29 = vld [vmem:[%s0 + $0xe] sm:$0xff]
    %v30 = vld [vmem:[%s0 + $0x16] sm:$0x3f]
    %v31 = vld [vmem:[%s0 + $0x1c] sm:$0xff]
    %v32 = vld [vmem:[%s0 + $0x24] sm:$0x3f]
    %v33 = vld [vmem:[%s0 + $0x2a] sm:$0xff]
    %v34 = vld [vmem:[%s0 + $0x32] sm:$0x3f]
    %v43 = vcombine.low %v27, %v29
    %v44 = vcombine.high %v27, %v29
    %v45 = vcombine.low %v31, %v33
    %v46 = vcombine.high %v31, %v33
    %v48 = vunpack.c.l.s4 1983009808
    %v49 = vunpack.c.0.s8 %v48
    %v50 = vlaneseq
    %v51 = vshrl.u32 %v50, 7
    %v52 = vsub.s32 %v49, %v51
    %v53 = vrot.slane %v43, %v52
    %v55 = vunpack.c.l.s4 1983009808
    %v56 = vunpack.c.0.s8 %v55
    %v57 = vlaneseq
    %v58 = vshrl.u32 %v57, 7
    %v59 = vsub.s32 %v56, %v58
    %v60 = vrot.slane %v44, %v59
    %v62 = vunpack.c.l.s4 1983009808
    %v63 = vunpack.c.0.s8 %v62
    %v64 = vlaneseq
    %v65 = vshrl.u32 %v64, 7
    %v66 = vsub.s32 %v63, %v65
    %v67 = vrot.slane %v45, %v66
    %v69 = vunpack.c.l.s4 1983009808
    %v70 = vunpack.c.0.s8 %v69
    %v71 = vlaneseq
    %v72 = vshrl.u32 %v71, 7
    %v73 = vsub.s32 %v70, %v72
    %v74 = vrot.slane %v46, %v73
    %v75 = vcombine.low %v53, %v67
    %v76 = vcombine.high %v53, %v67
    %v77 = vcombine.low %v60, %v74
    %v78 = vcombine.high %v60, %v74
    %v79 = vcombine.low %v28, %v30
    %v80 = vcombine.high %v28, %v30
    %v81 = vcombine.low %v32, %v34
    %v82 = vcombine.high %v32, %v34
    %v84 = vunpack.c.l.s4 1983009808
    %v85 = vunpack.c.0.s8 %v84
    %v86 = vlaneseq
    %v87 = vshrl.u32 %v86, 7
    %v88 = vsub.s32 %v85, %v87
    %v89 = vrot.slane %v79, %v88
    %v91 = vunpack.c.l.s4 1983009808
    %v92 = vunpack.c.0.s8 %v91
    %v93 = vlaneseq
    %v94 = vshrl.u32 %v93, 7
    %v95 = vsub.s32 %v92, %v94
    %v96 = vrot.slane %v80, %v95
    %v98 = vunpack.c.l.s4 1983009808
    %v99 = vunpack.c.0.s8 %v98
    %v100 = vlaneseq
    %v101 = vshrl.u32 %v100, 7
    %v102 = vsub.s32 %v99, %v101
    %v103 = vrot.slane %v81, %v102
    %v105 = vunpack.c.l.s4 1983009808
    %v106 = vunpack.c.0.s8 %v105
    %v107 = vlaneseq
    %v108 = vshrl.u32 %v107, 7
    %v109 = vsub.s32 %v106, %v108
    %v110 = vrot.slane %v82, %v109
    %v111 = vcombine.low %v89, %v103
    %v112 = vcombine.high %v89, %v103
    %v113 = vcombine.low %v96, %v110
    %v121 = vpack.c.bf16 %v75, %v75
    %v122 = vpack.c.bf16 %v76, %v76
    %v123 = vpack.c.bf16 %v77, %v77
    %v124 = vpack.c.bf16 %v78, %v78
    %v125 = vpack.c.bf16 %v111, %v111
    %v126 = vpack.c.bf16 %v112, %v112
    %v127 = vpack.c.bf16 %v113, %v113
    %v128 = vld [vmem:[%s1] sm:$0xf]
    %v129 = vld [vmem:[%s1 + $0x4] sm:$0xf]
    %v130 = vld [vmem:[%s1 + $0x8] sm:$0xf]
    %v131 = vld [vmem:[%s1 + $0xc] sm:$0xf]
    %v132 = vld [vmem:[%s1 + $0x10] sm:$0xf]
    %v133 = vld [vmem:[%s1 + $0x14] sm:$0xf]
    %v134 = vld [vmem:[%s1 + $0x18] sm:$0xf]
    %v135 = vld [vmem:[%s1 + $0x1c] sm:$0xf]
    %v136 = vld [vmem:[%s1 + $0x20] sm:$0xf]
    %v137 = vld [vmem:[%s1 + $0x24] sm:$0xf]
    %v138 = vld [vmem:[%s1 + $0x28] sm:$0xf]
    %v139 = vld [vmem:[%s1 + $0x2c] sm:$0xf]
    %v140 = vld [vmem:[%s1 + $0x30] sm:$0xf]
    %v141 = vld [vmem:[%s1 + $0x34] sm:$0xf]
    %v142 = vld [vmem:[%s1 + $0x38] sm:$0xf]
    %v143 = vld [vmem:[%s1 + $0x3c] sm:$0xf]
    %v144 = vld [vmem:[%s1 + $0x40] sm:$0xf]
    %v145 = vld [vmem:[%s1 + $0x44] sm:$0xf]
    %v146 = vld [vmem:[%s1 + $0x48] sm:$0xf]
    %v147 = vld [vmem:[%s1 + $0x4c] sm:$0xf]
    %v148 = vld [vmem:[%s1 + $0x50] sm:$0xf]
    %v149 = vld [vmem:[%s1 + $0x54] sm:$0xf]
    %v150 = vld [vmem:[%s1 + $0x58] sm:$0xf]
    %v151 = vld [vmem:[%s1 + $0x5c] sm:$0xf]
    %v152 = vld [vmem:[%s1 + $0x60] sm:$0xf]
    %v153 = vld [vmem:[%s1 + $0x64] sm:$0xf]
    %v154 = vld [vmem:[%s1 + $0x68] sm:$0xf]
    %v155 = vld [vmem:[%s1 + $0x6c] sm:$0xf]
    %v156 = vld [vmem:[%s1 + $0x70] sm:$0xf]
    %v157 = vld [vmem:[%s1 + $0x74] sm:$0xf]
    %v158 = vld [vmem:[%s1 + $0x78] sm:$0xf]
    %v159 = vld [vmem:[%s1 + $0x7c] sm:$0xf]
    %v160 = vld [vmem:[%s1 + $0x80] sm:$0xf]
    %v161 = vld [vmem:[%s1 + $0x84] sm:$0xf]
    %v162 = vld [vmem:[%s1 + $0x88] sm:$0xf]
    %v163 = vld [vmem:[%s1 + $0x8c] sm:$0xf]
    %v164 = vld [vmem:[%s1 + $0x90] sm:$0xf]
    %v165 = vld [vmem:[%s1 + $0x94] sm:$0xf]
    %v166 = vld [vmem:[%s1 + $0x98] sm:$0xf]
    %v167 = vld [vmem:[%s1 + $0x9c] sm:$0xf]
    %v168 = vld [vmem:[%s1 + $0xa0] sm:$0xf]
    %v169 = vld [vmem:[%s1 + $0xa4] sm:$0xf]
    %v170 = vld [vmem:[%s1 + $0xa8] sm:$0xf]
    %v171 = vld [vmem:[%s1 + $0xac] sm:$0xf]
    %v172 = vld [vmem:[%s1 + $0xb0] sm:$0xf]
    %v173 = vld [vmem:[%s1 + $0xb4] sm:$0xf]
    %v174 = vld [vmem:[%s1 + $0xb8] sm:$0xf]
    %v175 = vld [vmem:[%s1 + $0xbc] sm:$0xf]
    %v176 = vld [vmem:[%s1 + $0xc0] sm:$0xf]
    %v177 = vld [vmem:[%s1 + $0xc4] sm:$0xf]
    %v178 = vld [vmem:[%s1 + $0xc8] sm:$0xf]
    %v179 = vld [vmem:[%s1 + $0xcc] sm:$0xf]
    %v180 = vld [vmem:[%s1 + $0xd0] sm:$0xf]
    %v181 = vld [vmem:[%s1 + $0xd4] sm:$0xf]
    %v182 = vld [vmem:[%s1 + $0xd8] sm:$0xf]
    %v183 = vld [vmem:[%s1 + $0xdc] sm:$0xf]
    %v184 = vld [vmem:[%s1 + $0xe0] sm:$0xf]
    %v185 = vld [vmem:[%s1 + $0xe4] sm:$0xf]
    %v186 = vld [vmem:[%s1 + $0xe8] sm:$0xf]
    %v187 = vld [vmem:[%s1 + $0xec] sm:$0xf]
    %v188 = vld [vmem:[%s1 + $0xf0] sm:$0xf]
    %v189 = vld [vmem:[%s1 + $0xf4] sm:$0xf]
    %v190 = vld [vmem:[%s1 + $0xf8] sm:$0xf]
    %v191 = vld [vmem:[%s1 + $0xfc] sm:$0xf]
    %v192 = vld [vmem:[%s1 + $0x100] sm:$0xf]
    %v193 = vld [vmem:[%s1 + $0x104] sm:$0xf]
    %v194 = vld [vmem:[%s1 + $0x108] sm:$0xf]
    %v195 = vld [vmem:[%s1 + $0x10c] sm:$0xf]
    %v196 = vld [vmem:[%s1 + $0x110] sm:$0xf]
    %v197 = vld [vmem:[%s1 + $0x114] sm:$0xf]
    %v198 = vld [vmem:[%s1 + $0x118] sm:$0xf]
    %v199 = vld [vmem:[%s1 + $0x11c] sm:$0xf]
    %v200 = vld [vmem:[%s1 + $0x120] sm:$0xf]
    %v201 = vld [vmem:[%s1 + $0x124] sm:$0xf]
    %v202 = vld [vmem:[%s1 + $0x128] sm:$0xf]
    %v203 = vld [vmem:[%s1 + $0x12c] sm:$0xf]
    %v204 = vld [vmem:[%s1 + $0x130] sm:$0xf]
    %v205 = vld [vmem:[%s1 + $0x134] sm:$0xf]
    %v206 = vld [vmem:[%s1 + $0x138] sm:$0xf]
    %v207 = vld [vmem:[%s1 + $0x13c] sm:$0xf]
    %v208 = vld [vmem:[%s1 + $0x140] sm:$0xf]
    %v209 = vld [vmem:[%s1 + $0x144] sm:$0xf]
    %v210 = vld [vmem:[%s1 + $0x148] sm:$0xf]
    %v211 = vld [vmem:[%s1 + $0x14c] sm:$0xf]
    %v212 = vld [vmem:[%s1 + $0x150] sm:$0xf]
    %v213 = vld [vmem:[%s1 + $0x154] sm:$0xf]
    %v214 = vld [vmem:[%s1 + $0x158] sm:$0xf]
    %v215 = vld [vmem:[%s1 + $0x15c] sm:$0xf]
    %v216 = vld [vmem:[%s1 + $0x160] sm:$0xf]
    %v217 = vld [vmem:[%s1 + $0x164] sm:$0xf]
    %v218 = vld [vmem:[%s1 + $0x168] sm:$0xf]
    %v219 = vld [vmem:[%s1 + $0x16c] sm:$0xf]
    %v220 = vld [vmem:[%s1 + $0x170] sm:$0xf]
    %v221 = vld [vmem:[%s1 + $0x174] sm:$0xf]
    %v222 = vld [vmem:[%s1 + $0x178] sm:$0xf]
    %v223 = vld [vmem:[%s1 + $0x17c] sm:$0xf]
    %v224 = vld [vmem:[%s1 + $0x180] sm:$0xf]
    %v225 = vld [vmem:[%s1 + $0x184] sm:$0xf]
    %v226 = vld [vmem:[%s2] sm:$0x1]
    %v228 = vlaneseq
    %v229 = vshrl.u32 %v228, 7
    %v230 = vsub.s32 0, %v229
    %v231 = vrot.slane %v226, %v230
    %v331 = vunpack.c.l.b16 %v128
    %v332 = vunpack.c.l.b16 %v129
    %v333 = vunpack.c.l.b16 %v130
    %v334 = vunpack.c.l.b16 %v131
    %v335 = vunpack.c.l.b16 %v132
    %v336 = vunpack.c.l.b16 %v133
    %v337 = vunpack.c.l.b16 %v134
    %v338 = vunpack.c.l.b16 %v135
    %v339 = vunpack.c.l.b16 %v136
    %v340 = vunpack.c.l.b16 %v137
    %v341 = vunpack.c.l.b16 %v138
    %v342 = vunpack.c.l.b16 %v139
    %v343 = vunpack.c.l.b16 %v140
    %v344 = vunpack.c.l.b16 %v141
    %v345 = vunpack.c.l.b16 %v142
    %v346 = vunpack.c.l.b16 %v143
    %v347 = vunpack.c.l.b16 %v144
    %v348 = vunpack.c.l.b16 %v145
    %v349 = vunpack.c.l.b16 %v146
    %v350 = vunpack.c.l.b16 %v147
    %v351 = vunpack.c.l.b16 %v148
    %v352 = vunpack.c.l.b16 %v149
    %v353 = vunpack.c.l.b16 %v150
    %v354 = vunpack.c.l.b16 %v151
    %v355 = vunpack.c.l.b16 %v152
    %v356 = vunpack.c.l.b16 %v153
    %v357 = vunpack.c.l.b16 %v154
    %v358 = vunpack.c.l.b16 %v155
    %v359 = vunpack.c.l.b16 %v156
    %v360 = vunpack.c.l.b16 %v157
    %v361 = vunpack.c.l.b16 %v158
    %v362 = vunpack.c.l.b16 %v159
    %v363 = vunpack.c.l.b16 %v160
    %v364 = vunpack.c.l.b16 %v161
    %v365 = vunpack.c.l.b16 %v162
    %v366 = vunpack.c.l.b16 %v163
    %v367 = vunpack.c.l.b16 %v164
    %v368 = vunpack.c.l.b16 %v165
    %v369 = vunpack.c.l.b16 %v166
    %v370 = vunpack.c.l.b16 %v167
    %v371 = vunpack.c.l.b16 %v168
    %v372 = vunpack.c.l.b16 %v169
    %v373 = vunpack.c.l.b16 %v170
    %v374 = vunpack.c.l.b16 %v171
    %v375 = vunpack.c.l.b16 %v172
    %v376 = vunpack.c.l.b16 %v173
    %v377 = vunpack.c.l.b16 %v174
    %v378 = vunpack.c.l.b16 %v175
    %v379 = vunpack.c.l.b16 %v176
    %v380 = vunpack.c.l.b16 %v177
    %v381 = vunpack.c.l.b16 %v178
    %v382 = vunpack.c.l.b16 %v179
    %v383 = vunpack.c.l.b16 %v180
    %v384 = vunpack.c.l.b16 %v181
    %v385 = vunpack.c.l.b16 %v182
    %v386 = vunpack.c.l.b16 %v183
    %v387 = vunpack.c.l.b16 %v184
    %v388 = vunpack.c.l.b16 %v185
    %v389 = vunpack.c.l.b16 %v186
    %v390 = vunpack.c.l.b16 %v187
    %v391 = vunpack.c.l.b16 %v188
    %v392 = vunpack.c.l.b16 %v189
    %v393 = vunpack.c.l.b16 %v190
    %v394 = vunpack.c.l.b16 %v191
    %v395 = vunpack.c.l.b16 %v192
    %v396 = vunpack.c.l.b16 %v193
    %v397 = vunpack.c.l.b16 %v194
    %v398 = vunpack.c.l.b16 %v195
    %v399 = vunpack.c.l.b16 %v196
    %v400 = vunpack.c.l.b16 %v197
    %v401 = vunpack.c.l.b16 %v198
    %v402 = vunpack.c.l.b16 %v199
    %v403 = vunpack.c.l.b16 %v200
    %v404 = vunpack.c.l.b16 %v201
    %v405 = vunpack.c.l.b16 %v202
    %v406 = vunpack.c.l.b16 %v203
    %v407 = vunpack.c.l.b16 %v204
    %v408 = vunpack.c.l.b16 %v205
    %v409 = vunpack.c.l.b16 %v206
    %v410 = vunpack.c.l.b16 %v207
    %v411 = vunpack.c.l.b16 %v208
    %v412 = vunpack.c.l.b16 %v209
    %v413 = vunpack.c.l.b16 %v210
    %v414 = vunpack.c.l.b16 %v211
    %v415 = vunpack.c.l.b16 %v212
    %v416 = vunpack.c.l.b16 %v213
    %v417 = vunpack.c.l.b16 %v214
    %v418 = vunpack.c.l.b16 %v215
    %v419 = vunpack.c.l.b16 %v216
    %v420 = vunpack.c.l.b16 %v217
    %v421 = vunpack.c.l.b16 %v218
    %v422 = vunpack.c.l.b16 %v219
    %v423 = vunpack.c.l.b16 %v220
    %v424 = vunpack.c.l.b16 %v221
    %v425 = vunpack.c.l.b16 %v222
    %v426 = vunpack.c.l.b16 %v223
    %v427 = vunpack.c.l.b16 %v224
    %v428 = vunpack.c.l.b16 %v225
    %v429 = vpack.c.b16 %v332, %v331
    %v430 = vpack.c.b16 %v334, %v333
    %v431 = vpack.c.b16 %v336, %v335
    %v432 = vpack.c.b16 %v338, %v337
    %v433 = vpack.c.b16 %v340, %v339
    %v434 = vpack.c.b16 %v342, %v341
    %v435 = vpack.c.b16 %v344, %v343
    %v436 = vpack.c.b16 %v346, %v345
    %v437 = vpack.c.b16 %v348, %v347
    %v438 = vpack.c.b16 %v350, %v349
    %v439 = vpack.c.b16 %v352, %v351
    %v440 = vpack.c.b16 %v354, %v353
    %v441 = vpack.c.b16 %v356, %v355
    %v442 = vpack.c.b16 %v358, %v357
    %v443 = vpack.c.b16 %v360, %v359
    %v444 = vpack.c.b16 %v362, %v361
    %v445 = vpack.c.b16 %v364, %v363
    %v446 = vpack.c.b16 %v366, %v365
    %v447 = vpack.c.b16 %v368, %v367
    %v448 = vpack.c.b16 %v370, %v369
    %v449 = vpack.c.b16 %v372, %v371
    %v450 = vpack.c.b16 %v374, %v373
    %v451 = vpack.c.b16 %v376, %v375
    %v452 = vpack.c.b16 %v378, %v377
    %v453 = vpack.c.b16 %v380, %v379
    %v454 = vpack.c.b16 %v382, %v381
    %v455 = vpack.c.b16 %v384, %v383
    %v456 = vpack.c.b16 %v386, %v385
    %v457 = vpack.c.b16 %v388, %v387
    %v458 = vpack.c.b16 %v390, %v389
    %v459 = vpack.c.b16 %v392, %v391
    %v460 = vpack.c.b16 %v394, %v393
    %v461 = vpack.c.b16 %v396, %v395
    %v462 = vpack.c.b16 %v398, %v397
    %v463 = vpack.c.b16 %v400, %v399
    %v464 = vpack.c.b16 %v402, %v401
    %v465 = vpack.c.b16 %v404, %v403
    %v466 = vpack.c.b16 %v406, %v405
    %v467 = vpack.c.b16 %v408, %v407
    %v468 = vpack.c.b16 %v410, %v409
    %v469 = vpack.c.b16 %v412, %v411
    %v470 = vpack.c.b16 %v414, %v413
    %v471 = vpack.c.b16 %v416, %v415
    %v472 = vpack.c.b16 %v418, %v417
    %v473 = vpack.c.b16 %v420, %v419
    %v474 = vpack.c.b16 %v422, %v421
    %v475 = vpack.c.b16 %v424, %v423
    %v476 = vpack.c.b16 %v426, %v425
    %v477 = vpack.c.b16 %v428, %v427
    %vm527 = vcmask 130048
    %v529 = vsel %vm527, %v127, 0
    %531 = vmatprep.subr.bf16.mxu0 0
    %532 = vmatpush1.bf16.msra.mxu0 %v429
    %533 = vmatprep.subr.bf16.mxu0 0
    %534 = vmatpush1.bf16.msra.mxu0 %v430
    %535 = vmatprep.subr.bf16.mxu0 0
    %536 = vmatpush1.bf16.msra.mxu0 %v431
    %537 = vmatprep.subr.bf16.mxu0 0
    %538 = vmatpush1.bf16.msra.mxu0 %v432
    %539 = vmatprep.subr.bf16.mxu0 0
    %540 = vmatpush1.bf16.msra.mxu0 %v433
    %541 = vmatprep.subr.bf16.mxu0 0
    %542 = vmatpush1.bf16.msra.mxu0 %v434
    %543 = vmatprep.subr.bf16.mxu0 0
    %544 = vmatpush1.bf16.msra.mxu0 %v435
    %545 = vmatprep.subr.bf16.mxu0 0
    %546 = vmatpush1.bf16.msra.mxu0 %v436
    %547 = vmatprep.subr.bf16.mxu0 0
    %548 = vmatpush1.bf16.msra.mxu0 %v437
    %549 = vmatprep.subr.bf16.mxu0 0
    %550 = vmatpush1.bf16.msra.mxu0 %v438
    %551 = vmatprep.subr.bf16.mxu0 0
    %552 = vmatpush1.bf16.msra.mxu0 %v439
    %553 = vmatprep.subr.bf16.mxu0 0
    %554 = vmatpush1.bf16.msra.mxu0 %v440
    %555 = vmatprep.subr.bf16.mxu0 0
    %556 = vmatpush1.bf16.msra.mxu0 %v441
    %557 = vmatprep.subr.bf16.mxu0 0
    %558 = vmatpush1.bf16.msra.mxu0 %v442
    %559 = vmatprep.subr.bf16.mxu0 0
    %560 = vmatpush1.bf16.msra.mxu0 %v443
    %561 = vmatprep.subr.bf16.mxu0 0
    %562 = vmatpush1.bf16.msra.mxu0 %v444
    %563 = vmatprep.mubr.bf16.mxu0 %v122
    %564 = vmatmul.mubr.bf16.gmra.mrb[0].mxu0 %v121
    %v565 = vpop.f32.mrb[0].mxu0
    %v566 = vadd.f32 %v231, %v565
    %v567 = vpop.f32.mrb[0].mxu0
    %v568 = vpop.f32.mrb[0].mxu0
    %v569 = vpop.f32.mrb[0].mxu0
    %570 = vdwg.mxu0
    %571 = vmatprep.subr.bf16.mxu0 0
    %572 = vmatpush1.bf16.msra.mxu0 %v445
    %573 = vmatprep.subr.bf16.mxu0 0
    %574 = vmatpush1.bf16.msra.mxu0 %v446
    %575 = vmatprep.subr.bf16.mxu0 0
    %576 = vmatpush1.bf16.msra.mxu0 %v447
    %577 = vmatprep.subr.bf16.mxu0 0
    %578 = vmatpush1.bf16.msra.mxu0 %v448
    %579 = vmatprep.subr.bf16.mxu0 0
    %580 = vmatpush1.bf16.msra.mxu0 %v449
    %581 = vmatprep.subr.bf16.mxu0 0
    %582 = vmatpush1.bf16.msra.mxu0 %v450
    %583 = vmatprep.subr.bf16.mxu0 0
    %584 = vmatpush1.bf16.msra.mxu0 %v451
    %585 = vmatprep.subr.bf16.mxu0 0
    %586 = vmatpush1.bf16.msra.mxu0 %v452
    %587 = vmatprep.subr.bf16.mxu0 0
    %588 = vmatpush1.bf16.msra.mxu0 %v453
    %589 = vmatprep.subr.bf16.mxu0 0
    %590 = vmatpush1.bf16.msra.mxu0 %v454
    %591 = vmatprep.subr.bf16.mxu0 0
    %592 = vmatpush1.bf16.msra.mxu0 %v455
    %593 = vmatprep.subr.bf16.mxu0 0
    %594 = vmatpush1.bf16.msra.mxu0 %v456
    %595 = vmatprep.subr.bf16.mxu0 0
    %596 = vmatpush1.bf16.msra.mxu0 %v457
    %597 = vmatprep.subr.bf16.mxu0 0
    %598 = vmatpush1.bf16.msra.mxu0 %v458
    %599 = vmatprep.subr.bf16.mxu0 0
    %600 = vmatpush1.bf16.msra.mxu0 %v459
    %601 = vmatprep.subr.bf16.mxu0 0
    %602 = vmatpush1.bf16.msra.mxu0 %v460
    %603 = vmatprep.mubr.bf16.mxu0 %v124
    %604 = vmatmul.mubr.bf16.gmra.mrb[0].mxu0 %v123
    %v605 = vpop.f32.mrb[0].mxu0
    %v606 = vadd.f32 %v566, %v605
    %v607 = vpop.f32.mrb[0].mxu0
    %v608 = vpop.f32.mrb[0].mxu0
    %v609 = vpop.f32.mrb[0].mxu0
    %610 = vdwg.mxu0
    %611 = vmatprep.subr.bf16.mxu0 0
    %612 = vmatpush1.bf16.msra.mxu0 %v461
    %613 = vmatprep.subr.bf16.mxu0 0
    %614 = vmatpush1.bf16.msra.mxu0 %v462
    %615 = vmatprep.subr.bf16.mxu0 0
    %616 = vmatpush1.bf16.msra.mxu0 %v463
    %617 = vmatprep.subr.bf16.mxu0 0
    %618 = vmatpush1.bf16.msra.mxu0 %v464
    %619 = vmatprep.subr.bf16.mxu0 0
    %620 = vmatpush1.bf16.msra.mxu0 %v465
    %621 = vmatprep.subr.bf16.mxu0 0
    %622 = vmatpush1.bf16.msra.mxu0 %v466
    %623 = vmatprep.subr.bf16.mxu0 0
    %624 = vmatpush1.bf16.msra.mxu0 %v467
    %625 = vmatprep.subr.bf16.mxu0 0
    %626 = vmatpush1.bf16.msra.mxu0 %v468
    %627 = vmatprep.subr.bf16.mxu0 0
    %628 = vmatpush1.bf16.msra.mxu0 %v469
    %629 = vmatprep.subr.bf16.mxu0 0
    %630 = vmatpush1.bf16.msra.mxu0 %v470
    %631 = vmatprep.subr.bf16.mxu0 0
    %632 = vmatpush1.bf16.msra.mxu0 %v471
    %633 = vmatprep.subr.bf16.mxu0 0
    %634 = vmatpush1.bf16.msra.mxu0 %v472
    %635 = vmatprep.subr.bf16.mxu0 0
    %636 = vmatpush1.bf16.msra.mxu0 %v473
    %637 = vmatprep.subr.bf16.mxu0 0
    %638 = vmatpush1.bf16.msra.mxu0 %v474
    %639 = vmatprep.subr.bf16.mxu0 0
    %640 = vmatpush1.bf16.msra.mxu0 %v475
    %641 = vmatprep.subr.bf16.mxu0 0
    %642 = vmatpush1.bf16.msra.mxu0 %v476
    %643 = vmatprep.mubr.bf16.mxu0 %v126
    %644 = vmatmul.mubr.bf16.gmra.mrb[0].mxu0 %v125
    %v645 = vpop.f32.mrb[0].mxu0
    %v646 = vadd.f32 %v606, %v645
    %v647 = vpop.f32.mrb[0].mxu0
    %v648 = vpop.f32.mrb[0].mxu0
    %v649 = vpop.f32.mrb[0].mxu0
    %650 = vdwg.mxu0
    %651 = vmatprep.subr.bf16.mxu0 0
    %652 = vmatpush1.bf16.msra.mxu0 %v477
    %653 = vmatprep.subr.bf16.mxu0 0
    %654 = vmatpush1.bf16.msra.mxu0 0
    %655 = vmatprep.subr.bf16.mxu0 0
    %656 = vmatpush1.bf16.msra.mxu0 0
    %657 = vmatprep.subr.bf16.mxu0 0
    %658 = vmatpush1.bf16.msra.mxu0 0
    %659 = vmatprep.subr.bf16.mxu0 0
    %660 = vmatpush1.bf16.msra.mxu0 0
    %661 = vmatprep.subr.bf16.mxu0 0
    %662 = vmatpush1.bf16.msra.mxu0 0
    %663 = vmatprep.subr.bf16.mxu0 0
    %664 = vmatpush1.bf16.msra.mxu0 0
    %665 = vmatprep.subr.bf16.mxu0 0
    %666 = vmatpush1.bf16.msra.mxu0 0
    %667 = vmatprep.subr.bf16.mxu0 0
    %668 = vmatpush1.bf16.msra.mxu0 0
    %669 = vmatprep.subr.bf16.mxu0 0
    %670 = vmatpush1.bf16.msra.mxu0 0
    %671 = vmatprep.subr.bf16.mxu0 0
    %672 = vmatpush1.bf16.msra.mxu0 0
    %673 = vmatprep.subr.bf16.mxu0 0
    %674 = vmatpush1.bf16.msra.mxu0 0
    %675 = vmatprep.subr.bf16.mxu0 0
    %676 = vmatpush1.bf16.msra.mxu0 0
    %677 = vmatprep.subr.bf16.mxu0 0
    %678 = vmatpush1.bf16.msra.mxu0 0
    %679 = vmatprep.subr.bf16.mxu0 0
    %680 = vmatpush1.bf16.msra.mxu0 0
    %681 = vmatprep.subr.bf16.mxu0 0
    %682 = vmatpush1.bf16.msra.mxu0 0
    %683 = vmatprep.mubr.bf16.mxu0 0
    %684 = vmatmul.mubr.bf16.gmra.mrb[0].mxu0 %v529
    %v685 = vpop.f32.mrb[0].mxu0
    %v686 = vadd.f32 %v646, %v685
    %v687 = vpop.f32.mrb[0].mxu0
    %v688 = vpop.f32.mrb[0].mxu0
    %v689 = vpop.f32.mrb[0].mxu0
    %690 = vdwg.mxu0
    %v691 = vmax.f32 %v686, 0.0
    %v692 = vpack.c.bf16 %v691, %v691
    %v693 = vld [vmem:[%s3] sm:$0xf]
    %v694 = vld [vmem:[%s3 + $0x4] sm:$0xf]
    %v695 = vld [vmem:[%s3 + $0x8] sm:$0xf]
    %v696 = vld [vmem:[%s3 + $0xc] sm:$0xf]
    %v697 = vld [vmem:[%s3 + $0x10] sm:$0xf]
    %v698 = vld [vmem:[%s3 + $0x14] sm:$0xf]
    %v699 = vld [vmem:[%s3 + $0x18] sm:$0xf]
    %v700 = vld [vmem:[%s3 + $0x1c] sm:$0xf]
    %v701 = vld [vmem:[%s3 + $0x20] sm:$0xf]
    %v702 = vld [vmem:[%s3 + $0x24] sm:$0xf]
    %v703 = vld [vmem:[%s3 + $0x28] sm:$0xf]
    %v704 = vld [vmem:[%s3 + $0x2c] sm:$0xf]
    %v705 = vld [vmem:[%s3 + $0x30] sm:$0xf]
    %v706 = vld [vmem:[%s3 + $0x34] sm:$0xf]
    %v707 = vld [vmem:[%s3 + $0x38] sm:$0xf]
    %v708 = vld [vmem:[%s3 + $0x3c] sm:$0xf]
    %v709 = vld [vmem:[%s4] sm:$0x1]
    %v711 = vlaneseq
    %v712 = vshrl.u32 %v711, 7
    %v713 = vsub.s32 0, %v712
    %v714 = vrot.slane %v709, %v713
    %v732 = vunpack.c.l.b16 %v693
    %v733 = vunpack.c.l.b16 %v694
    %v734 = vunpack.c.l.b16 %v695
    %v735 = vunpack.c.l.b16 %v696
    %v736 = vunpack.c.l.b16 %v697
    %v737 = vunpack.c.l.b16 %v698
    %v738 = vunpack.c.l.b16 %v699
    %v739 = vunpack.c.l.b16 %v700
    %v740 = vunpack.c.l.b16 %v701
    %v741 = vunpack.c.l.b16 %v702
    %v742 = vunpack.c.l.b16 %v703
    %v743 = vunpack.c.l.b16 %v704
    %v744 = vunpack.c.l.b16 %v705
    %v745 = vunpack.c.l.b16 %v706
    %v746 = vunpack.c.l.b16 %v707
    %v747 = vunpack.c.l.b16 %v708
    %v748 = vpack.c.b16 %v733, %v732
    %v749 = vpack.c.b16 %v735, %v734
    %v750 = vpack.c.b16 %v737, %v736
    %v751 = vpack.c.b16 %v739, %v738
    %v752 = vpack.c.b16 %v741, %v740
    %v753 = vpack.c.b16 %v743, %v742
    %v754 = vpack.c.b16 %v745, %v744
    %v755 = vpack.c.b16 %v747, %v746
    %764 = vmatprep.subr.bf16.mxu0 0
    %765 = vmatpush1.bf16.msra.mxu0 %v748
    %766 = vmatprep.subr.bf16.mxu0 0
    %767 = vmatpush1.bf16.msra.mxu0 %v749
    %768 = vmatprep.subr.bf16.mxu0 0
    %769 = vmatpush1.bf16.msra.mxu0 %v750
    %770 = vmatprep.subr.bf16.mxu0 0
    %771 = vmatpush1.bf16.msra.mxu0 %v751
    %772 = vmatprep.subr.bf16.mxu0 0
    %773 = vmatpush1.bf16.msra.mxu0 %v752
    %774 = vmatprep.subr.bf16.mxu0 0
    %775 = vmatpush1.bf16.msra.mxu0 %v753
    %776 = vmatprep.subr.bf16.mxu0 0
    %777 = vmatpush1.bf16.msra.mxu0 %v754
    %778 = vmatprep.subr.bf16.mxu0 0
    %779 = vmatpush1.bf16.msra.mxu0 %v755
    %780 = vmatprep.subr.bf16.mxu0 0
    %781 = vmatpush1.bf16.msra.mxu0 0
    %782 = vmatprep.subr.bf16.mxu0 0
    %783 = vmatpush1.bf16.msra.mxu0 0
    %784 = vmatprep.subr.bf16.mxu0 0
    %785 = vmatpush1.bf16.msra.mxu0 0
    %786 = vmatprep.subr.bf16.mxu0 0
    %787 = vmatpush1.bf16.msra.mxu0 0
    %788 = vmatprep.subr.bf16.mxu0 0
    %789 = vmatpush1.bf16.msra.mxu0 0
    %790 = vmatprep.subr.bf16.mxu0 0
    %791 = vmatpush1.bf16.msra.mxu0 0
    %792 = vmatprep.subr.bf16.mxu0 0
    %793 = vmatpush1.bf16.msra.mxu0 0
    %794 = vmatprep.subr.bf16.mxu0 0
    %795 = vmatpush1.bf16.msra.mxu0 0
    %796 = vmatprep.mubr.bf16.mxu0 0
    %797 = vmatmul.mubr.bf16.gmra.mrb[0].mxu0 %v692
    %v798 = vpop.f32.mrb[0].mxu0
    %v799 = vadd.f32 %v714, %v798
    %v800 = vpop.f32.mrb[0].mxu0
    %v801 = vpop.f32.mrb[0].mxu0
    %v802 = vpop.f32.mrb[0].mxu0
    %803 = vdwg.mxu0
    %v804 = vmax.f32 %v799, 0.0
    %v805 = vpack.c.bf16 %v804, %v804
    %v806 = vld [vmem:[%s5] sm:$0xf]
    %v807 = vld [vmem:[%s5 + $0x4] sm:$0xf]
    %v808 = vld [vmem:[%s5 + $0x8] sm:$0xf]
    %v809 = vld [vmem:[%s5 + $0xc] sm:$0xf]
    %v810 = vld [vmem:[%s5 + $0x10] sm:$0xf]
    %v811 = vld [vmem:[%s5 + $0x14] sm:$0xf]
    %v812 = vld [vmem:[%s5 + $0x18] sm:$0xf]
    %v813 = vld [vmem:[%s5 + $0x1c] sm:$0xf]
    %v814 = vld [vmem:[%s6] sm:$0x1]
    %v816 = vlaneseq
    %v817 = vshrl.u32 %v816, 7
    %v818 = vsub.s32 0, %v817
    %v819 = vrot.slane %v814, %v818
    %v829 = vunpack.c.l.b16 %v806
    %v830 = vunpack.c.l.b16 %v807
    %v831 = vunpack.c.l.b16 %v808
    %v832 = vunpack.c.l.b16 %v809
    %v833 = vunpack.c.l.b16 %v810
    %v834 = vunpack.c.l.b16 %v811
    %v835 = vunpack.c.l.b16 %v812
    %v836 = vunpack.c.l.b16 %v813
    %v837 = vpack.c.b16 %v830, %v829
    %v838 = vpack.c.b16 %v832, %v831
    %v839 = vpack.c.b16 %v834, %v833
    %v840 = vpack.c.b16 %v836, %v835
    %vm845 = vcmask 523264
    %v847 = vsel %vm845, %v805, 0
    %849 = vmatprep.subr.bf16.mxu0 0
    %850 = vmatpush1.bf16.msra.mxu0 %v837
    %851 = vmatprep.subr.bf16.mxu0 0
    %852 = vmatpush1.bf16.msra.mxu0 %v838
    %853 = vmatprep.subr.bf16.mxu0 0
    %854 = vmatpush1.bf16.msra.mxu0 %v839
    %855 = vmatprep.subr.bf16.mxu0 0
    %856 = vmatpush1.bf16.msra.mxu0 %v840
    %857 = vmatprep.subr.bf16.mxu0 0
    %858 = vmatpush1.bf16.msra.mxu0 0
    %859 = vmatprep.subr.bf16.mxu0 0
    %860 = vmatpush1.bf16.msra.mxu0 0
    %861 = vmatprep.subr.bf16.mxu0 0
    %862 = vmatpush1.bf16.msra.mxu0 0
    %863 = vmatprep.subr.bf16.mxu0 0
    %864 = vmatpush1.bf16.msra.mxu0 0
    %865 = vmatprep.subr.bf16.mxu0 0
    %866 = vmatpush1.bf16.msra.mxu0 0
    %867 = vmatprep.subr.bf16.mxu0 0
    %868 = vmatpush1.bf16.msra.mxu0 0
    %869 = vmatprep.subr.bf16.mxu0 0
    %870 = vmatpush1.bf16.msra.mxu0 0
    %871 = vmatprep.subr.bf16.mxu0 0
    %872 = vmatpush1.bf16.msra.mxu0 0
    %873 = vmatprep.subr.bf16.mxu0 0
    %874 = vmatpush1.bf16.msra.mxu0 0
    %875 = vmatprep.subr.bf16.mxu0 0
    %876 = vmatpush1.bf16.msra.mxu0 0
    %877 = vmatprep.subr.bf16.mxu0 0
    %878 = vmatpush1.bf16.msra.mxu0 0
    %879 = vmatprep.subr.bf16.mxu0 0
    %880 = vmatpush1.bf16.msra.mxu0 0
    %881 = vmatprep.mubr.bf16.mxu0 0
    %882 = vmatmul.mubr.bf16.gmra.mrb[0].mxu0 %v847
    %v883 = vpop.f32.mrb[0].mxu0
    %v884 = vadd.f32 %v819, %v883
    %v885 = vpop.f32.mrb[0].mxu0
    %v886 = vpop.f32.mrb[0].mxu0
    %v887 = vpop.f32.mrb[0].mxu0
    %888 = vdwg.mxu0
    %v889 = vpack.c.bf16 %v884, %v884
    %v892 = vunpack.c.l.s4 1966171168
    %v893 = vunpack.c.0.s8 %v892
    %v894 = vlaneseq
    %v895 = vshrl.u32 %v894, 7
    %v896 = vsub.s32 %v893, %v895
    %v897 = vrot.slane %v889, %v896
    %v898 = vcombine.high %v897, %v897
    %v900 = vunpack.c.l.s4 1966171168
    %v901 = vunpack.c.0.s8 %v900
    %v902 = vlaneseq
    %v903 = vshrl.u32 %v902, 7
    %v904 = vsub.s32 %v901, %v903
    %v905 = vrot.slane %v897, %v904
    %v907 = vunpack.c.l.s4 1966171168
    %v908 = vunpack.c.0.s8 %v907
    %v909 = vlaneseq
    %v910 = vshrl.u32 %v909, 7
    %v911 = vsub.s32 %v908, %v910
    %v912 = vrot.slane %v898, %v911
    %v913 = vcombine.high %v905, %v905
    %v914 = vcombine.high %v912, %v912
    %919 = vst [vmem:[#allocation2] sm:$0x1] %v905
    %920 = vst [vmem:[#allocation2 + $0x1] sm:$0x1] %v912
    %921 = vst [vmem:[#allocation2 + $0x2] sm:$0x1] %v913
    %922 = vst [vmem:[#allocation2 + $0x3] sm:$0x1] %v914
    // Predicated region
    $region30: #{mlp_forward.1} parent=1 // pred_check
      _
    $region31: #{mlp_forward.1} parent=1 // pred_check_branch
      %924 = sbr.rel (0) target = $region33
    $region32: #{mlp_forward.1} parent=1 // pred_region
      // Predicated region
      $region34: #{mlp_forward.1} parent=32 // pred_check
        _
      $region35: #{mlp_forward.1} parent=32 // pred_check_branch
        %926 = sbr.rel (0) target = $region37
      $region36: #{mlp_forward.1} parent=32 // pred_region
        // Predicated region
        $region38: #{mlp_forward.1} parent=36 // pred_check
          _
        $region39: #{mlp_forward.1} parent=36 // pred_check_branch
          %928 = sbr.rel target = $region41
        $region40: #{mlp_forward.1} parent=36 // pred_region
          // Predicated region
          $region53: #{mlp_forward.1} parent=40 // pred_check
            _
          $region54: #{mlp_forward.1} parent=40 // pred_check_branch
            %943 = sbr.rel (0) target = $region56
          $region55: #{mlp_forward.1} parent=40 // pred_region
            loop: start=0, step=1, limit=1
            $region57: #{mlp_forward.1} parent=55 // loop_pre_header
              _
            $region58: #{mlp_forward.1} parent=55 // loop_header
              %s946 = sphi 0, %s950
              %p947 = scmp.ge.s32.totalorder %s946, 1
              %s951 = sphi [#allocation2], [#allocation2]
              %s952 = sphi %s7, %s7
            $region59: #{mlp_forward.1} parent=55 // loop_header_branch
              %949 = sbr.rel (%p947) target = $region63
            $region60: #{mlp_forward.1} parent=55 // loop_body
              %v953 = vld [vmem:[%s951] sm:$0x1]
              %954 = vst [vmem:[%s952] sm:$0x1] %v953
            $region61: #{mlp_forward.1} parent=55 // loop_footer
              %s950 = sadd.s32 1, %s946
            $region62: #{mlp_forward.1} parent=55 // loop_footer_branch
              %945 = sbr.rel target = $region58
            $region63: #{mlp_forward.1} parent=55 // loop_exit
              _
          $region56: #{mlp_forward.1} parent=40 // pred_fallthru
            _
        $region41: #{mlp_forward.1} parent=36 // pred_fallthru
          _
        // Predicated region
        $region42: #{mlp_forward.1} parent=36 // pred_check
          _
        $region43: #{mlp_forward.1} parent=36 // pred_check_branch
          %930 = sbr.rel (0) target = $region45
        $region44: #{mlp_forward.1} parent=36 // pred_region
          loop: start=0, step=1, limit=1
          $region46: #{mlp_forward.1} parent=44 // loop_pre_header
            _
          $region47: #{mlp_forward.1} parent=44 // loop_header
            %s933 = sphi 0, %s937
            %p934 = scmp.ge.s32.totalorder %s933, 1
            %s938 = sphi [#allocation2], [#allocation2]
            %s939 = sphi %s7, %s7
          $region48: #{mlp_forward.1} parent=44 // loop_header_branch
            %936 = sbr.rel (%p934) target = $region52
          $region49: #{mlp_forward.1} parent=44 // loop_body
            %v940 = vld [vmem:[%s938] sm:$0x1]
            %941 = vst [vmem:[%s939] sm:$0x1] %v940
          $region50: #{mlp_forward.1} parent=44 // loop_footer
            %s937 = sadd.s32 1, %s933
          $region51: #{mlp_forward.1} parent=44 // loop_footer_branch
            %932 = sbr.rel target = $region47
          $region52: #{mlp_forward.1} parent=44 // loop_exit
            _
        $region45: #{mlp_forward.1} parent=36 // pred_fallthru
          _
      $region37: #{mlp_forward.1} parent=32 // pred_fallthru
        _
      %955 = vnop
    $region33: #{mlp_forward.1} parent=1 // pred_fallthru
      _
    // Predicated region
    $region64: #{mlp_forward.1} parent=1 // pred_check
      _
    $region65: #{mlp_forward.1} parent=1 // pred_check_branch
      %957 = sbr.rel (0) target = $region67
    $region66: #{mlp_forward.1} parent=1 // pred_region
      _
    $region67: #{mlp_forward.1} parent=1 // pred_fallthru
      _

</llo_original>
